<compile_context>
chip_gen: v7x
topology: tpu7x:2x2x1
jax: 0.10.0
libtpu: 0.0.40
codegen_flags: <defaults>
</compile_context>

<pallas_src>
import functools

import jax
import jax.numpy as jnp
from jax import lax
from jax.experimental import pallas as pl
from jax.experimental.pallas import tpu as pltpu


# --------------------------------------------------------------------------- kernel
def _attentive_pool_kernel(x_ref, wcat_ref, bv_ref, o_ref, *, num_heads, head_dim,
                           valid_s, approx_recip):
    """One grid step: pool `TB = block_b` batch rows.

    x_ref:    (TB, S, D)   batch-row block (S possibly zero-padded to a mult. of 8)
    wcat_ref: (D, D + H)   fused [Wv.T | W.T] weights (grid-invariant, resident)
    bv_ref:   (1, D)       value bias, added once to the pooled output
    o_ref:    (TB, D)      pooled output slab (dense lane/sublane store)
    """
    TB, S, D = x_ref.shape
    H = num_heads

    # --- single fused MXU pass for both projections ---------------------------
    x2 = x_ref[...].reshape(TB * S, D)                 # free relayout (S % 8 == 0)
    y = jnp.dot(x2, wcat_ref[...], preferred_element_type=jnp.float32)
    v = y[:, :D].reshape(TB, S, D)                     # value projection (f32)
    scores = y[:, D:].reshape(TB, S, H)                # attention scores (f32)
    # (score bias omitted: constant along S -> cancels exactly under the softmax)

    # --- mask zero-padded sequence rows so they get zero attention weight -----
    if valid_s < S:
        srow = lax.broadcasted_iota(jnp.int32, (TB, S, H), 1)
        scores = jnp.where(srow < valid_s, scores, jnp.float32(-1e30))

    # --- softmax over the sequence axis (f32 math, v5e-safe) ------------------
    s_max = jnp.max(scores, axis=1, keepdims=True)     # (TB, 1, H)
    e = jnp.exp(scores - s_max)                        # (TB, S, H)
    denom = jnp.sum(e, axis=1, keepdims=True)          # (TB, 1, H)
    if approx_recip:
        probs = e * pl.reciprocal(denom, approx=True)
    else:
        probs = e / denom

    # --- per-head weighted sum over S: pure VPU/XLU, no MXU -------------------
    # probs_full[b, s, c] = probs[b, s, c // head_dim]  (repeat-interleave on lanes)
    probs_full = jnp.repeat(probs, head_dim, axis=2)   # (TB, S, D)
    pooled = jnp.sum(v * probs_full, axis=1)           # (TB, D)

    # value bias folded post-pooling (per-head probs sum to 1 over S)
    o_ref[...] = (pooled + bv_ref[...]).astype(o_ref.dtype)


# --------------------------------------------------------------- VMEM / chip sizing
def _chip_profile():
    """Return (physical VMEM bytes, per-step VMEM budget, want >= 2 grid steps)."""
    vmem_phys = 128 << 20
    try:
        info = pltpu.get_tpu_info()
        vmem_phys = int(getattr(info, "vmem_capacity_bytes", vmem_phys))
    except Exception:
        pass
    kind = ""
    try:
        kind = jax.devices()[0].device_kind.lower()
    except Exception:
        pass
    is_v7x = ("7x" in kind) or ("v7" in kind) or (vmem_phys <= (64 << 20))
    is_v5e = ("v5 lite" in kind) or ("v5e" in kind) or ("v5litepod" in kind)
    if is_v7x:
        # 64 MiB physical, 2 TensorCores: tight tiles + keep >= 2 parallel steps.
        return vmem_phys, max(16 << 20, int(0.55 * vmem_phys)), True
    if is_v5e:
        # Single TC; budget well above the 16 MiB default scoped-VMEM limit.
        return vmem_phys, 48 << 20, False
    # v6e and other single-logical-core chips (128 MiB VMEM): large tiles.
    return vmem_phys, 64 << 20, False


def _step_vmem_bytes(tb, s, d, h, x_itemsize, out_itemsize):
    """Conservative per-grid-step VMEM footprint: pipeline buffers + resident
    weights + every f32 intermediate the kernel body materializes."""
    f32 = 4
    total = 2 * tb * s * d * x_itemsize        # x tile, double-buffered
    total += 2 * tb * d * out_itemsize         # output slab, double-buffered
    total += 2 * d * (d + h) * x_itemsize      # fused weights (count 2 bufs to be safe)
    total += 2 * d * f32                       # value bias
    total += tb * s * (d + h) * f32            # y = x @ [Wv.T | W.T]
    total += 3 * tb * s * d * f32              # v, probs_full, v * probs_full
    total += 3 * tb * s * h * f32              # scores, e, probs
    total += 2 * tb * d * f32                  # pooled (+ bias)
    return total


def _pick_block_b(B, s, d, h, x_itemsize, out_itemsize, budget, want_multi):
    """Largest divisor of B whose true per-step footprint fits the budget.
    On multi-TensorCore targets keep >= 2 grid steps so the 'parallel' batch axis
    can be sharded.  Taking the largest fitting divisor also prefers block_b >= 8
    (full (8,128) output sublane tile) whenever B and VMEM allow."""
    cap = B if not (want_multi and B > 1) else max(1, B // 2)
    best = 1
    for tb in range(1, cap + 1):
        if B % tb == 0 and _step_vmem_bytes(tb, s, d, h, x_itemsize,
                                            out_itemsize) <= budget:
            best = tb
    return best


# --------------------------------------------------------------------------- wrapper
def fuse_attentive_pool_weights(w, w_v, compute_dtype):
    """Fused weights [Wv.T | W.T] -> (D, D + H).  Precompute once (or keep under
    jit with constant weights) so the transpose/concat never hits the hot path."""
    w_t = jnp.asarray(w, compute_dtype).T       # (D, H)
    wv_t = jnp.asarray(w_v, compute_dtype).T    # (D, D)
    return jnp.concatenate([wv_t, w_t], axis=1)  # value cols first -> lane 0 aligned


def attentive_pool(x, w, b, w_v, b_v, num_heads, *, block_b=None,
                   approx_recip=False, fused_weights=None):
    """x: (B, S, D); w: (H, D); b: (H,) or None; w_v: (D, D); b_v: (D,) or None.

    `b` is accepted for API parity but unused: it is constant along the softmax
    (sequence) axis and cancels exactly.  `approx_recip=True` uses the EUP
    approximate reciprocal for the softmax denominator (off by default: with it
    on, probs no longer sum to exactly 1 and the folded b_v picks up that error).
    Best MXU/store efficiency needs D a multiple of 128 (true for real ViT widths).
    """
    B, S, D = x.shape
    H = w.shape[0]
    assert H == num_heads, "num_heads must match w.shape[0]"
    assert D % num_heads == 0, "hidden size must be divisible by num_heads"
    head_dim = D // num_heads

    # MXU operands in x.dtype (bf16 stays bf16 on v6e/v7x); accum/softmax in f32.
    cdt = x.dtype
    w_cat = (fused_weights if fused_weights is not None
             else fuse_attentive_pool_weights(w, w_v, cdt))
    assert w_cat.shape == (D, D + H)
    bv2 = (jnp.zeros((1, D), jnp.float32) if b_v is None
           else jnp.asarray(b_v, jnp.float32).reshape(1, D))
    del b  # cancels under the softmax over S — no DMA, no VMEM, no VPU add

    # Pad S to a multiple of 8 so in-kernel (TB,S,D)<->(TB*S,D) reshapes are free
    # layout changes; padded rows are masked to zero attention weight in-kernel.
    S_pad = -(-S // 8) * 8
    x_in = x if S_pad == S else jnp.pad(x, ((0, 0), (0, S_pad - S), (0, 0)))

    vmem_phys, budget, want_multi = _chip_profile()
    x_isz = jnp.dtype(cdt).itemsize
    o_isz = jnp.dtype(x.dtype).itemsize
    if block_b is None:
        block_b = _pick_block_b(B, S_pad, D, H, x_isz, o_isz, budget, want_multi)
    assert B % block_b == 0, "block_b must divide B"

    footprint = _step_vmem_bytes(block_b, S_pad, D, H, x_isz, o_isz)
    vmem_limit = int(min(max(vmem_phys - (8 << 20), 32 << 20),
                         max(2 * footprint, 64 << 20)))
    # TODO(synk): if a single (1, S_pad, D) row ever exceeds the VMEM budget
    # (extreme S), add an "arbitrary" S grid axis with a running-softmax
    # accumulator; not needed at typical ViT sizes.

    kernel = functools.partial(_attentive_pool_kernel, num_heads=H,
                               head_dim=head_dim, valid_s=S,
                               approx_recip=approx_recip)

    def _call(single_buffer_weights):
        # Grid-invariant operands are never re-fetched; request a single pipeline
        # buffer to save VMEM (~D*(D+H) bytes of headroom at real ViT widths).
        const_kwargs = ({"pipeline_mode": pl.Buffered(1)}
                        if single_buffer_weights else {})
        return pl.pallas_call(
            kernel,
            out_shape=jax.ShapeDtypeStruct((B, D), x.dtype),
            grid_spec=pltpu.PrefetchScalarGridSpec(
                num_scalar_prefetch=0,
                grid=(B // block_b,),
                in_specs=[
                    pl.BlockSpec((block_b, S_pad, D), lambda i: (i, 0, 0)),  # x rows
                    pl.BlockSpec((D, D + H), lambda i: (0, 0), **const_kwargs),
                    pl.BlockSpec((1, D), lambda i: (0, 0), **const_kwargs),
                ],
                out_specs=pl.BlockSpec((block_b, D), lambda i: (i, 0)),  # dense slab
            ),
            compiler_params=pltpu.CompilerParams(
                dimension_semantics=("parallel",),
                vmem_limit_bytes=vmem_limit),
        )(x_in, w_cat, bv2)

    try:
        return _call(True)
    except Exception:
        # pl.Buffered(1) single-buffering is an optimization only; fall back to
        # default double-buffering if this JAX build rejects buffer_count == 1.
        return _call(False)


def attentive_pool_ref(x, w, b, w_v, b_v, num_heads):
    """Pure-JAX reference matching the PyTorch semantics (biases included)."""
    B, S, D = x.shape
    head_dim = D // num_heads
    scores = x @ w.T + (0.0 if b is None else b)                      # (B, S, H)
    probs = jax.nn.softmax(scores, axis=-2)                           # softmax over S
    v = (x @ w_v.T + (0.0 if b_v is None else b_v)).reshape(B, S, num_heads, head_dim)
    out = jnp.sum(v * probs[..., None], axis=1)                       # (B, H, hd)
    return out.reshape(B, D)


if __name__ == "__main__":
    # Small shapes consistent with the module: hidden_size=32, heads=4 -> head_dim=8
    B, S, D, H = 2, 8, 32, 4
    key = jax.random.PRNGKey(0)
    kx, kw, kb, kwv, kbv = jax.random.split(key, 5)

    x = jax.random.normal(kx, (B, S, D), dtype=jnp.float32)

    # Deterministic parameter init (mirrors trunc_normal_(std=0.02) weights +
    # uniform(-1/sqrt(fan_in), 1/sqrt(fan_in)) biases of nn.Linear).
    w = 0.02 * jax.random.truncated_normal(kw, -2.0, 2.0, (H, D), dtype=jnp.float32)
    w_v = 0.02 * jax.random.truncated_normal(kwv, -2.0, 2.0, (D, D), dtype=jnp.float32)
    bound = 1.0 / jnp.sqrt(jnp.float32(D))
    b = jax.random.uniform(kb, (H,), minval=-bound, maxval=bound, dtype=jnp.float32)
    b_v = jax.random.uniform(kbv, (D,), minval=-bound, maxval=bound, dtype=jnp.float32)

    out = jax.block_until_ready(attentive_pool(x, w, b, w_v, b_v, H))
    ref = attentive_pool_ref(x, w, b, w_v, b_v, H)
    assert out.shape == (B, D)
    assert jnp.allclose(out, ref, atol=1e-5, rtol=1e-5), (
        f"max abs err {jnp.max(jnp.abs(out - ref))}")

    # Also exercise the sequence-padding / masking path (S not a multiple of 8).
    S2 = 5
    x2 = jax.random.normal(kx, (B, S2, D), dtype=jnp.float32)
    out2 = jax.block_until_ready(attentive_pool(x2, w, b, w_v, b_v, H))
    ref2 = attentive_pool_ref(x2, w, b, w_v, b_v, H)
    assert jnp.allclose(out2, ref2, atol=1e-5, rtol=1e-5), (
        f"max abs err {jnp.max(jnp.abs(out2 - ref2))}")

    print("KERNEL_OK")
</pallas_src>

<mosaic_0001>
module attributes {stable_mosaic.version = 11 : i64} {
  func.func @_attentive_pool_kernel(%arg0: i32, %arg1: memref<2x8x32xf32, #tpu.memory_space<vmem>>, %arg2: memref<32x36xf32, #tpu.memory_space<vmem>>, %arg3: memref<1x32xf32, #tpu.memory_space<vmem>>, %arg4: memref<2x32xf32, #tpu.memory_space<vmem>>) attributes {dimension_semantics = [#tpu.dimension_semantics<parallel>], iteration_bounds = array<i64: 1>, scalar_prefetch = 0 : i64, scratch_operands = 0 : i64, tpu.core_type = #tpu.core_type<tc>, window_params = [{transform_indices = @transform_0, window_bounds = array<i64: 2, 8, 32>}, {pipeline_mode = #tpu.pipeline_mode<synchronous>, transform_indices = @transform_1, window_bounds = array<i64: 32, 36>}, {pipeline_mode = #tpu.pipeline_mode<synchronous>, transform_indices = @transform_2, window_bounds = array<i64: 1, 32>}, {transform_indices = @transform_3, window_bounds = array<i64: 2, 32>}]} {
    %c0 = arith.constant 0 : index
    %c0_0 = arith.constant 0 : index
    %c0_1 = arith.constant 0 : index
    %0 = vector.load %arg1[%c0, %c0_0, %c0_1] : memref<2x8x32xf32, #tpu.memory_space<vmem>>, vector<2x8x32xf32>
    %1 = vector.shape_cast %0 : vector<2x8x32xf32> to vector<16x32xf32>
    %c0_2 = arith.constant 0 : index
    %c0_3 = arith.constant 0 : index
    %2 = vector.load %arg2[%c0_2, %c0_3] : memref<32x36xf32, #tpu.memory_space<vmem>>, vector<32x36xf32>
    %cst = arith.constant dense<0.000000e+00> : vector<16x36xf32>
    %3 = tpu.matmul %1, %2, %cst {dimension_numbers = #tpu.dot_dimension_numbers<[1], [0], [0], [1], [0, 0, 1, 1], [], []>} : vector<16x32xf32>, vector<32x36xf32>, vector<16x36xf32> -> vector<16x36xf32>
    %4 = vector.extract_strided_slice %3 {offsets = [0, 0], sizes = [16, 32], strides = [1, 1]} : vector<16x36xf32> to vector<16x32xf32>
    %5 = vector.shape_cast %4 : vector<16x32xf32> to vector<2x8x32xf32>
    %6 = vector.extract_strided_slice %3 {offsets = [0, 32], sizes = [16, 4], strides = [1, 1]} : vector<16x36xf32> to vector<16x4xf32>
    %7 = vector.shape_cast %6 : vector<16x4xf32> to vector<2x8x4xf32>
    %cst_4 = arith.constant dense<0xFF800000> : vector<2x4xf32>
    %8 = vector.multi_reduction <maximumf>, %7, %cst_4 [1] : vector<2x8x4xf32> to vector<2x4xf32>
    %9 = vector.shape_cast %8 : vector<2x4xf32> to vector<2x1x4xf32>
    %10 = vector.broadcast %9 : vector<2x1x4xf32> to vector<2x8x4xf32>
    %11 = arith.subf %7, %10 : vector<2x8x4xf32>
    %12 = math.exp %11 : vector<2x8x4xf32>
    %cst_5 = arith.constant dense<0.000000e+00> : vector<2x4xf32>
    %13 = vector.multi_reduction <add>, %12, %cst_5 [1] : vector<2x8x4xf32> to vector<2x4xf32>
    %14 = vector.shape_cast %13 : vector<2x4xf32> to vector<2x1x4xf32>
    %15 = vector.broadcast %14 : vector<2x1x4xf32> to vector<2x8x4xf32>
    %16 = arith.divf %12, %15 : vector<2x8x4xf32>
    %17 = vector.shape_cast %16 : vector<2x8x4xf32> to vector<2x8x4x1xf32>
    %18 = vector.broadcast %17 : vector<2x8x4x1xf32> to vector<2x8x4x8xf32>
    %19 = vector.shape_cast %18 : vector<2x8x4x8xf32> to vector<2x8x32xf32>
    %20 = arith.mulf %5, %19 : vector<2x8x32xf32>
    %cst_6 = arith.constant dense<0.000000e+00> : vector<2x32xf32>
    %21 = vector.multi_reduction <add>, %20, %cst_6 [1] : vector<2x8x32xf32> to vector<2x32xf32>
    %c0_7 = arith.constant 0 : index
    %c0_8 = arith.constant 0 : index
    %22 = vector.load %arg3[%c0_7, %c0_8] : memref<1x32xf32, #tpu.memory_space<vmem>>, vector<1x32xf32>
    %23 = vector.broadcast %22 : vector<1x32xf32> to vector<2x32xf32>
    %24 = arith.addf %21, %23 : vector<2x32xf32>
    %c0_9 = arith.constant 0 : index
    %c0_10 = arith.constant 0 : index
    %25 = vector.load %arg4[%c0_9, %c0_10] : memref<2x32xf32, #tpu.memory_space<vmem>>, vector<2x32xf32>
    tpu.vector_store %arg4[%c0_9, %c0_10], %24 {strides = array<i32>} : memref<2x32xf32, #tpu.memory_space<vmem>>, vector<2x32xf32>,
    return
  }
  func.func @transform_0(%arg0: i32) -> (i32, i32, i32) {
    %c0_i32 = arith.constant 0 : i32
    %c0_i32_0 = arith.constant 0 : i32
    %c0_i32_1 = arith.constant 0 : i32
    return %arg0, %c0_i32, %c0_i32_0 : i32, i32, i32
  }
  func.func @transform_1(%arg0: i32) -> (i32, i32) {
    %c0_i32 = arith.constant 0 : i32
    %c0_i32_0 = arith.constant 0 : i32
    %c0_i32_1 = arith.constant 0 : i32
    return %c0_i32, %c0_i32_0 : i32, i32
  }
  func.func @transform_2(%arg0: i32) -> (i32, i32) {
    %c0_i32 = arith.constant 0 : i32
    %c0_i32_0 = arith.constant 0 : i32
    %c0_i32_1 = arith.constant 0 : i32
    return %c0_i32, %c0_i32_0 : i32, i32
  }
  func.func @transform_3(%arg0: i32) -> (i32, i32) {
    %c0_i32 = arith.constant 0 : i32
    %c0_i32_0 = arith.constant 0 : i32
    return %arg0, %c0_i32 : i32, i32
  }
}

module attributes {stable_mosaic.version = 11 : i64} {
  func.func @_attentive_pool_kernel(%arg0: i32, %arg1: memref<2x8x32xf32, #tpu.memory_space<vmem>>, %arg2: memref<32x36xf32, #tpu.memory_space<vmem>>, %arg3: memref<1x32xf32, #tpu.memory_space<vmem>>, %arg4: memref<2x32xf32, #tpu.memory_space<vmem>>) attributes {dimension_semantics = [#tpu.dimension_semantics<parallel>], iteration_bounds = array<i64: 1>, scalar_prefetch = 0 : i64, scratch_operands = 0 : i64, tpu.core_type = #tpu.core_type<tc>, window_params = [{transform_indices = @transform_0, window_bounds = array<i64: 2, 8, 32>}, {pipeline_mode = #tpu.pipeline_mode<synchronous>, transform_indices = @transform_1, window_bounds = array<i64: 32, 36>}, {pipeline_mode = #tpu.pipeline_mode<synchronous>, transform_indices = @transform_2, window_bounds = array<i64: 1, 32>}, {transform_indices = @transform_3, window_bounds = array<i64: 2, 32>}]} {
    %c0 = arith.constant 0 : index
    %c0_0 = arith.constant 0 : index
    %c0_1 = arith.constant 0 : index
    %0 = vector.load %arg1[%c0, %c0_0, %c0_1] : memref<2x8x32xf32, #tpu.memory_space<vmem>>, vector<2x8x32xf32>
    %1 = vector.shape_cast %0 : vector<2x8x32xf32> to vector<16x32xf32>
    %c0_2 = arith.constant 0 : index
    %c0_3 = arith.constant 0 : index
    %2 = vector.load %arg2[%c0_2, %c0_3] : memref<32x36xf32, #tpu.memory_space<vmem>>, vector<32x36xf32>
    %cst = arith.constant dense<0.000000e+00> : vector<16x36xf32>
    %3 = tpu.matmul %1, %2, %cst {dimension_numbers = #tpu.dot_dimension_numbers<[1], [0], [0], [1], [0, 0, 1, 1], [], []>} : vector<16x32xf32>, vector<32x36xf32>, vector<16x36xf32> -> vector<16x36xf32>
    %4 = vector.extract_strided_slice %3 {offsets = [0, 0], sizes = [16, 32], strides = [1, 1]} : vector<16x36xf32> to vector<16x32xf32>
    %5 = vector.shape_cast %4 : vector<16x32xf32> to vector<2x8x32xf32>
    %6 = vector.extract_strided_slice %3 {offsets = [0, 32], sizes = [16, 4], strides = [1, 1]} : vector<16x36xf32> to vector<16x4xf32>
    %7 = vector.shape_cast %6 : vector<16x4xf32> to vector<2x8x4xf32>
    %cst_4 = arith.constant dense<0xFF800000> : vector<2x4xf32>
    %8 = vector.multi_reduction <maximumf>, %7, %cst_4 [1] : vector<2x8x4xf32> to vector<2x4xf32>
    %9 = vector.shape_cast %8 : vector<2x4xf32> to vector<2x1x4xf32>
    %10 = vector.broadcast %9 : vector<2x1x4xf32> to vector<2x8x4xf32>
    %11 = arith.subf %7, %10 : vector<2x8x4xf32>
    %12 = math.exp %11 : vector<2x8x4xf32>
    %cst_5 = arith.constant dense<0.000000e+00> : vector<2x4xf32>
    %13 = vector.multi_reduction <add>, %12, %cst_5 [1] : vector<2x8x4xf32> to vector<2x4xf32>
    %14 = vector.shape_cast %13 : vector<2x4xf32> to vector<2x1x4xf32>
    %15 = vector.broadcast %14 : vector<2x1x4xf32> to vector<2x8x4xf32>
    %16 = arith.divf %12, %15 : vector<2x8x4xf32>
    %17 = vector.shape_cast %16 : vector<2x8x4xf32> to vector<2x8x4x1xf32>
    %18 = vector.broadcast %17 : vector<2x8x4x1xf32> to vector<2x8x4x8xf32>
    %19 = vector.shape_cast %18 : vector<2x8x4x8xf32> to vector<2x8x32xf32>
    %20 = arith.mulf %5, %19 : vector<2x8x32xf32>
    %cst_6 = arith.constant dense<0.000000e+00> : vector<2x32xf32>
    %21 = vector.multi_reduction <add>, %20, %cst_6 [1] : vector<2x8x32xf32> to vector<2x32xf32>
    %c0_7 = arith.constant 0 : index
    %c0_8 = arith.constant 0 : index
    %22 = vector.load %arg3[%c0_7, %c0_8] : memref<1x32xf32, #tpu.memory_space<vmem>>, vector<1x32xf32>
    %23 = vector.broadcast %22 : vector<1x32xf32> to vector<2x32xf32>
    %24 = arith.addf %21, %23 : vector<2x32xf32>
    %c0_9 = arith.constant 0 : index
    %c0_10 = arith.constant 0 : index
    %25 = vector.load %arg4[%c0_9, %c0_10] : memref<2x32xf32, #tpu.memory_space<vmem>>, vector<2x32xf32>
    tpu.vector_store %arg4[%c0_9, %c0_10], %24 {strides = array<i32>} : memref<2x32xf32, #tpu.memory_space<vmem>>, vector<2x32xf32>,
    return
  }
  func.func @transform_0(%arg0: i32) -> (i32, i32, i32) {
    %c0_i32 = arith.constant 0 : i32
    %c0_i32_0 = arith.constant 0 : i32
    %c0_i32_1 = arith.constant 0 : i32
    return %arg0, %c0_i32, %c0_i32_0 : i32, i32, i32
  }
  func.func @transform_1(%arg0: i32) -> (i32, i32) {
    %c0_i32 = arith.constant 0 : i32
    %c0_i32_0 = arith.constant 0 : i32
    %c0_i32_1 = arith.constant 0 : i32
    return %c0_i32, %c0_i32_0 : i32, i32
  }
  func.func @transform_2(%arg0: i32) -> (i32, i32) {
    %c0_i32 = arith.constant 0 : i32
    %c0_i32_0 = arith.constant 0 : i32
    %c0_i32_1 = arith.constant 0 : i32
    return %c0_i32, %c0_i32_0 : i32, i32
  }
  func.func @transform_3(%arg0: i32) -> (i32, i32) {
    %c0_i32 = arith.constant 0 : i32
    %c0_i32_0 = arith.constant 0 : i32
    return %arg0, %c0_i32 : i32, i32
  }
}

</mosaic_0001>

<llo_original>
// kernel: tpu_custom_call.1
$region0: #{tpu_custom_call.1}
  #allocation0 [shape = 'u32[]', space=smem, size = 0x4, offset = 0x4, fixed_abs, tag = 'smem constant byte address 0x4 - core index']
  #allocation1 [shape = 'u32[144,128]{1,0:T(1,128)}', space=vmem, size = 0x12000, scoped, tag = 'internal scratch']
  %s0 = inlined_call_operand.hbm [shape: f32[2,8,32], index: 0, kind: input, shape index: {}]
  %s1 = inlined_call_operand.hbm [shape: f32[32,36], index: 1, kind: input, shape index: {}]
  %s2 = inlined_call_operand.hbm [shape: f32[1,32], index: 2, kind: input, shape index: {}]
  %s3 = inlined_call_operand.hbm [shape: f32[2,32], index: 3, kind: output, shape index: {}]
  %s4 = sld [smem:[#allocation0]]
  $region34: #{tpu_custom_call.1} parent=0
    _
  %s6 = ssub.s32 1, %s4
  %s7 = scalar_select 0, %s6, %s4
  $region1: #{tpu_custom_call.1} parent=0
    #allocation2 [shape = 'u8[8192]{0}', space=vmem, size = 0x2000, scoped, tag = 'input window, operand 0, single buffered']
    #allocation3 [shape = 's32[1]{0}', space=sflag, size = 0x4, scoped, tag = 'scoped memory for tpu_custom_call.1']
    #allocation4 [shape = 's32[1]{0}', space=sflag, size = 0x4, scoped, tag = 'scoped memory for tpu_custom_call.1']
    #allocation5 [shape = 'u8[16384]{0}', space=vmem, size = 0x4000, scoped, tag = 'input window, operand 1, single buffered']
    #allocation6 [shape = 's32[1]{0}', space=sflag, size = 0x4, scoped, tag = 'scoped memory for tpu_custom_call.1']
    #allocation7 [shape = 'u8[512]{0}', space=vmem, size = 0x400, scoped, tag = 'input window, operand 2, single buffered']
    #allocation8 [shape = 'u8[1024]{0}', space=vmem, size = 0x400, scoped, tag = 'output window, operand 0, single buffered']
    %8 = vsyncpa [#allocation3], 0
    %9 = vsyncpa [#allocation6], 0
    %10 = vsyncpa [#allocation4], 0
    // Predicated region
    $region2: #{tpu_custom_call.1} parent=1 // pred_check
      _
    $region3: #{tpu_custom_call.1} parent=1 // pred_check_branch
      %12 = sbr.rel (0) target = $region5
    $region4: #{tpu_custom_call.1} parent=1 // pred_region
      %s14 = ssub.s32 256, 256
      %15 = vsyncadd [#allocation3], %s14
      %s16 = sshll.u32 [#allocation2], 4
      %s17 = int_to_ptr.vmem [resolvable:$true] %s16
      %22 = dma.hbm_to_vmem [thread:$0]  %s0, 256, %s17, [#allocation3], 128, 128, 8
    $region5: #{tpu_custom_call.1} parent=1 // pred_fallthru
      _
    // Predicated region
    $region6: #{tpu_custom_call.1} parent=1 // pred_check
      _
    $region7: #{tpu_custom_call.1} parent=1 // pred_check_branch
      %24 = sbr.rel (0) target = $region9
    $region8: #{tpu_custom_call.1} parent=1 // pred_region
      %s26 = ssub.s32 512, 512
      %27 = vsyncadd [#allocation6], %s26
      %s28 = sshll.u32 [#allocation5], 4
      %s29 = int_to_ptr.vmem [resolvable:$true] %s28
      %34 = dma.hbm_to_vmem [thread:$0]  %s1, 512, %s29, [#allocation6], 128, 128, 8
    $region9: #{tpu_custom_call.1} parent=1 // pred_fallthru
      _
    // Predicated region
    $region10: #{tpu_custom_call.1} parent=1 // pred_check
      _
    $region11: #{tpu_custom_call.1} parent=1 // pred_check_branch
      %36 = sbr.rel (0) target = $region13
    $region12: #{tpu_custom_call.1} parent=1 // pred_region
      %s38 = ssub.s32 16, 16
      %39 = vsyncadd [#allocation6], %s38
      %s41 = sshll.u32 [#allocation7], 4
      %s42 = int_to_ptr.vmem [resolvable:$true] %s41
      %44 = dma.hbm_to_vmem [thread:$0]  %s2, 16, %s42, [#allocation6]
    $region13: #{tpu_custom_call.1} parent=1 // pred_fallthru
      _
    // Predicated region
    $region14: #{tpu_custom_call.1} parent=1 // pred_check
      _
    $region15: #{tpu_custom_call.1} parent=1 // pred_check_branch
      %46 = sbr.rel (0) target = $region17
    $region16: #{tpu_custom_call.1} parent=1 // pred_region
      %47 = dma.done [#allocation3], 256
    $region17: #{tpu_custom_call.1} parent=1 // pred_fallthru
      _
    // Predicated region
    $region18: #{tpu_custom_call.1} parent=1 // pred_check
      _
    $region19: #{tpu_custom_call.1} parent=1 // pred_check_branch
      %49 = sbr.rel (0) target = $region21
    $region20: #{tpu_custom_call.1} parent=1 // pred_region
      %50 = dma.done [#allocation6], 512
    $region21: #{tpu_custom_call.1} parent=1 // pred_fallthru
      _
    // Predicated region
    $region22: #{tpu_custom_call.1} parent=1 // pred_check
      _
    $region23: #{tpu_custom_call.1} parent=1 // pred_check_branch
      %52 = sbr.rel (0) target = $region25
    $region24: #{tpu_custom_call.1} parent=1 // pred_region
      %53 = dma.done [#allocation6], 16
    $region25: #{tpu_custom_call.1} parent=1 // pred_fallthru
      _
    %v54 = vld [vmem:[#allocation2] sm:$0xff]
    %v55 = vld [vmem:[#allocation2 + $0x8] sm:$0xff]
    %v56 = vld [vmem:[#allocation5] sm:$0xff]
    %v57 = vld [vmem:[#allocation5 + $0x8] sm:$0xff]
    %v58 = vld [vmem:[#allocation5 + $0x10] sm:$0xff]
    %v59 = vld [vmem:[#allocation5 + $0x18] sm:$0xff]
    %vm60 = vcmask 261120
    %v62 = vsel %vm60, %v54, 0
    %v65 = vsel %vm60, %v55, 0
    %67 = vmatprep.subr.mxu0 0.0
    %68 = vmatpush1.msra.mxu0 %v56
    %69 = vmatprep.subr.mxu0 0.0
    %70 = vmatpush1.msra.mxu0 %v57
    %71 = vmatprep.subr.mxu0 0.0
    %72 = vmatpush1.msra.mxu0 %v58
    %73 = vmatprep.subr.mxu0 0.0
    %74 = vmatpush1.msra.mxu0 %v59
    %75 = vmatprep.subr.mxu0 0.0
    %76 = vmatpush1.msra.mxu0 0.0
    %77 = vmatprep.subr.mxu0 0.0
    %78 = vmatpush1.msra.mxu0 0.0
    %79 = vmatprep.subr.mxu0 0.0
    %80 = vmatpush1.msra.mxu0 0.0
    %81 = vmatprep.subr.mxu0 0.0
    %82 = vmatpush1.msra.mxu0 0.0
    %83 = vmatprep.subr.mxu0 0.0
    %84 = vmatpush1.msra.mxu0 0.0
    %85 = vmatprep.subr.mxu0 0.0
    %86 = vmatpush1.msra.mxu0 0.0
    %87 = vmatprep.subr.mxu0 0.0
    %88 = vmatpush1.msra.mxu0 0.0
    %89 = vmatprep.subr.mxu0 0.0
    %90 = vmatpush1.msra.mxu0 0.0
    %91 = vmatprep.subr.mxu0 0.0
    %92 = vmatpush1.msra.mxu0 0.0
    %93 = vmatprep.subr.mxu0 0.0
    %94 = vmatpush1.msra.mxu0 0.0
    %95 = vmatprep.subr.mxu0 0.0
    %96 = vmatpush1.msra.mxu0 0.0
    %97 = vmatprep.subr.mxu0 0.0
    %98 = vmatpush1.msra.mxu0 0.0
    %99 = vmatprep.subr.mxu0 0.0
    %100 = vmatpush1.msra.mxu0 0.0
    %101 = vmatprep.subr.mxu0 0.0
    %102 = vmatpush1.msra.mxu0 0.0
    %103 = vmatprep.subr.mxu0 0.0
    %104 = vmatpush1.msra.mxu0 0.0
    %105 = vmatprep.subr.mxu0 0.0
    %106 = vmatpush1.msra.mxu0 0.0
    %107 = vmatprep.subr.mxu0 0.0
    %108 = vmatpush1.msra.mxu0 0.0
    %109 = vmatprep.subr.mxu0 0.0
    %110 = vmatpush1.msra.mxu0 0.0
    %111 = vmatprep.subr.mxu0 0.0
    %112 = vmatpush1.msra.mxu0 0.0
    %113 = vmatprep.subr.mxu0 0.0
    %114 = vmatpush1.msra.mxu0 0.0
    %115 = vmatprep.subr.mxu0 0.0
    %116 = vmatpush1.msra.mxu0 0.0
    %117 = vmatprep.subr.mxu0 0.0
    %118 = vmatpush1.msra.mxu0 0.0
    %119 = vmatprep.subr.mxu0 0.0
    %120 = vmatpush1.msra.mxu0 0.0
    %121 = vmatprep.subr.mxu0 0.0
    %122 = vmatpush1.msra.mxu0 0.0
    %123 = vmatprep.subr.mxu0 0.0
    %124 = vmatpush1.msra.mxu0 0.0
    %125 = vmatprep.subr.mxu0 0.0
    %126 = vmatpush1.msra.mxu0 0.0
    %127 = vmatprep.subr.mxu0 0.0
    %128 = vmatpush1.msra.mxu0 0.0
    %129 = vmatprep.subr.mxu0 0.0
    %130 = vmatpush1.msra.mxu0 0.0
    %131 = vmatprep.mubr.f32.mxu0 0.0
    %132 = vmatmul.mubr.f32.gmra.mrb[0].mxu0 %v62
    %v133 = vpop.f32.mrb[0].mxu0
    %v134 = vadd.f32 0.0, %v133
    %v135 = vpop.f32.mrb[0].mxu0
    %136 = vmatprep.mubr.f32.mxu0 0.0
    %137 = vmatmul.mubr.f32.gmra.mrb[0].mxu0 %v65
    %v138 = vpop.f32.mrb[0].mxu0
    %v139 = vadd.f32 0.0, %v138
    %v140 = vpop.f32.mrb[0].mxu0
    %141 = vdwg.mxu0
    %vm142 = vcmask 294144
    %v143 = vsel %vm142, %v134, -inf
    %v144 = vrot.slane %v143, 4
    %v145 = vmax.f32 %v143, %v144
    %v146 = vrot.slane %v145, 2
    %v147 = vmax.f32 %v145, %v146
    %v148 = vrot.slane %v147, 1
    %v149 = vmax.f32 %v147, %v148
    %v150 = vsel %vm142, %v139, -inf
    %v151 = vrot.slane %v150, 4
    %v152 = vmax.f32 %v150, %v151
    %v153 = vrot.slane %v152, 2
    %v154 = vmax.f32 %v152, %v153
    %v155 = vrot.slane %v154, 1
    %v156 = vmax.f32 %v154, %v155
    %v157 = vsub.f32 %v134, %v149
    %v158 = vsub.f32 %v139, %v156
    %v159 = vmul.f32 %v157, 1.442695
    %v160 = vpow.pop %v159
    %v161 = vmul.f32 %v158, 1.442695
    %v162 = vpow.pop %v161
    %v163 = vsel %vm142, %v160, 0.0
    %v164 = vrot.slane %v163, 4
    %v165 = vadd.f32 %v163, %v164
    %v166 = vrot.slane %v165, 2
    %v167 = vadd.f32 %v165, %v166
    %v168 = vrot.slane %v167, 1
    %v169 = vadd.f32 %v167, %v168
    %v170 = vsel %vm142, %v162, 0.0
    %v171 = vrot.slane %v170, 4
    %v172 = vadd.f32 %v170, %v171
    %v173 = vrot.slane %v172, 2
    %v174 = vadd.f32 %v172, %v173
    %v175 = vrot.slane %v174, 1
    %v176 = vadd.f32 %v174, %v175
    %v177 = vrcp.pop %v169
    %v178 = vmul.f32 %v160, %v177
    %v179 = vrcp.pop %v176
    %v180 = vmul.f32 %v162, %v179
    %v181 = vlaneseq
    %v182 = vshrl.u32 %v181, 7
    %v183 = vsub.s32 0, %v182
    %v184 = vrot.slane %v178, %v183
    %s186 = sor.u32 256, 32
    %187 = vbcast.lane.b32.xlu0 %v184, %s186
    %v188 = vpop.permute.xlu0 %187
    %v189 = vlaneseq
    %v190 = vshrl.u32 %v189, 7
    %v191 = vsub.s32 1, %v190
    %v192 = vrot.slane %v178, %v191
    %s194 = sor.u32 256, 32
    %195 = vbcast.lane.b32.xlu0 %v192, %s194
    %v196 = vpop.permute.xlu0 %195
    %v197 = vlaneseq
    %v198 = vshrl.u32 %v197, 7
    %v199 = vsub.s32 2, %v198
    %v200 = vrot.slane %v178, %v199
    %s202 = sor.u32 256, 32
    %203 = vbcast.lane.b32.xlu0 %v200, %s202
    %v204 = vpop.permute.xlu0 %203
    %v205 = vlaneseq
    %v206 = vshrl.u32 %v205, 7
    %v207 = vsub.s32 3, %v206
    %v208 = vrot.slane %v178, %v207
    %s210 = sor.u32 256, 32
    %211 = vbcast.lane.b32.xlu0 %v208, %s210
    %v212 = vpop.permute.xlu0 %211
    %v213 = vlaneseq
    %v214 = vshrl.u32 %v213, 7
    %v215 = vsub.s32 4, %v214
    %v216 = vrot.slane %v178, %v215
    %s218 = sor.u32 256, 32
    %219 = vbcast.lane.b32.xlu0 %v216, %s218
    %v220 = vpop.permute.xlu0 %219
    %v221 = vlaneseq
    %v222 = vshrl.u32 %v221, 7
    %v223 = vsub.s32 5, %v222
    %v224 = vrot.slane %v178, %v223
    %s226 = sor.u32 256, 32
    %227 = vbcast.lane.b32.xlu0 %v224, %s226
    %v228 = vpop.permute.xlu0 %227
    %v229 = vlaneseq
    %v230 = vshrl.u32 %v229, 7
    %v231 = vsub.s32 6, %v230
    %v232 = vrot.slane %v178, %v231
    %s234 = sor.u32 256, 32
    %235 = vbcast.lane.b32.xlu0 %v232, %s234
    %v236 = vpop.permute.xlu0 %235
    %v237 = vlaneseq
    %v238 = vshrl.u32 %v237, 7
    %v239 = vsub.s32 7, %v238
    %v240 = vrot.slane %v178, %v239
    %s242 = sor.u32 256, 32
    %243 = vbcast.lane.b32.xlu0 %v240, %s242
    %v244 = vpop.permute.xlu0 %243
    %v245 = vlaneseq
    %v246 = vshrl.u32 %v245, 7
    %v247 = vsub.s32 0, %v246
    %v248 = vrot.slane %v180, %v247
    %s250 = sor.u32 256, 32
    %251 = vbcast.lane.b32.xlu0 %v248, %s250
    %v252 = vpop.permute.xlu0 %251
    %v253 = vlaneseq
    %v254 = vshrl.u32 %v253, 7
    %v255 = vsub.s32 1, %v254
    %v256 = vrot.slane %v180, %v255
    %s258 = sor.u32 256, 32
    %259 = vbcast.lane.b32.xlu0 %v256, %s258
    %v260 = vpop.permute.xlu0 %259
    %v261 = vlaneseq
    %v262 = vshrl.u32 %v261, 7
    %v263 = vsub.s32 2, %v262
    %v264 = vrot.slane %v180, %v263
    %s266 = sor.u32 256, 32
    %267 = vbcast.lane.b32.xlu0 %v264, %s266
    %v268 = vpop.permute.xlu0 %267
    %v269 = vlaneseq
    %v270 = vshrl.u32 %v269, 7
    %v271 = vsub.s32 3, %v270
    %v272 = vrot.slane %v180, %v271
    %s274 = sor.u32 256, 32
    %275 = vbcast.lane.b32.xlu0 %v272, %s274
    %v276 = vpop.permute.xlu0 %275
    %v277 = vlaneseq
    %v278 = vshrl.u32 %v277, 7
    %v279 = vsub.s32 4, %v278
    %v280 = vrot.slane %v180, %v279
    %s282 = sor.u32 256, 32
    %283 = vbcast.lane.b32.xlu0 %v280, %s282
    %v284 = vpop.permute.xlu0 %283
    %v285 = vlaneseq
    %v286 = vshrl.u32 %v285, 7
    %v287 = vsub.s32 5, %v286
    %v288 = vrot.slane %v180, %v287
    %s290 = sor.u32 256, 32
    %291 = vbcast.lane.b32.xlu0 %v288, %s290
    %v292 = vpop.permute.xlu0 %291
    %v293 = vlaneseq
    %v294 = vshrl.u32 %v293, 7
    %v295 = vsub.s32 6, %v294
    %v296 = vrot.slane %v180, %v295
    %s298 = sor.u32 256, 32
    %299 = vbcast.lane.b32.xlu0 %v296, %s298
    %v300 = vpop.permute.xlu0 %299
    %v301 = vlaneseq
    %v302 = vshrl.u32 %v301, 7
    %v303 = vsub.s32 7, %v302
    %v304 = vrot.slane %v180, %v303
    %s306 = sor.u32 256, 32
    %307 = vbcast.lane.b32.xlu0 %v304, %s306
    %v308 = vpop.permute.xlu0 %307
    %v309 = vcombine.low %v188, %v204
    %v311 = vunpack.c.l.s4 1983009808
    %v312 = vunpack.c.0.s8 %v311
    %v313 = vlaneseq
    %v314 = vshrl.u32 %v313, 7
    %v315 = vsub.s32 %v312, %v314
    %v316 = vrot.slane %v309, %v315
    %v317 = vcombine.low %v196, %v212
    %v319 = vunpack.c.l.s4 1983009808
    %v320 = vunpack.c.0.s8 %v319
    %v321 = vlaneseq
    %v322 = vshrl.u32 %v321, 7
    %v323 = vsub.s32 %v320, %v322
    %v324 = vrot.slane %v317, %v323
    %v325 = vcombine.low %v220, %v236
    %v327 = vunpack.c.l.s4 1983009808
    %v328 = vunpack.c.0.s8 %v327
    %v329 = vlaneseq
    %v330 = vshrl.u32 %v329, 7
    %v331 = vsub.s32 %v328, %v330
    %v332 = vrot.slane %v325, %v331
    %v333 = vcombine.low %v228, %v244
    %v335 = vunpack.c.l.s4 1983009808
    %v336 = vunpack.c.0.s8 %v335
    %v337 = vlaneseq
    %v338 = vshrl.u32 %v337, 7
    %v339 = vsub.s32 %v336, %v338
    %v340 = vrot.slane %v333, %v339
    %v341 = vcombine.low %v316, %v324
    %v342 = vcombine.high %v316, %v324
    %v344 = vunpack.c.l.s4 1934713408
    %v345 = vunpack.c.0.s8 %v344
    %v346 = vlaneseq
    %v347 = vshrl.u32 %v346, 7
    %v348 = vsub.s32 %v345, %v347
    %v349 = vrot.slane %v341, %v348
    %v351 = vunpack.c.l.s4 1934713408
    %v352 = vunpack.c.0.s8 %v351
    %v353 = vlaneseq
    %v354 = vshrl.u32 %v353, 7
    %v355 = vsub.s32 %v352, %v354
    %v356 = vrot.slane %v342, %v355
    %v357 = vcombine.low %v332, %v340
    %v358 = vcombine.high %v332, %v340
    %v360 = vunpack.c.l.s4 1934713408
    %v361 = vunpack.c.0.s8 %v360
    %v362 = vlaneseq
    %v363 = vshrl.u32 %v362, 7
    %v364 = vsub.s32 %v361, %v363
    %v365 = vrot.slane %v357, %v364
    %v367 = vunpack.c.l.s4 1934713408
    %v368 = vunpack.c.0.s8 %v367
    %v369 = vlaneseq
    %v370 = vshrl.u32 %v369, 7
    %v371 = vsub.s32 %v368, %v370
    %v372 = vrot.slane %v358, %v371
    %v373 = vcombine.low %v349, %v365
    %v374 = vcombine.high %v349, %v365
    %v375 = vcombine.low %v356, %v372
    %v376 = vcombine.high %v356, %v372
    %v377 = vcombine.low %v252, %v268
    %v379 = vunpack.c.l.s4 1983009808
    %v380 = vunpack.c.0.s8 %v379
    %v381 = vlaneseq
    %v382 = vshrl.u32 %v381, 7
    %v383 = vsub.s32 %v380, %v382
    %v384 = vrot.slane %v377, %v383
    %v385 = vcombine.low %v260, %v276
    %v387 = vunpack.c.l.s4 1983009808
    %v388 = vunpack.c.0.s8 %v387
    %v389 = vlaneseq
    %v390 = vshrl.u32 %v389, 7
    %v391 = vsub.s32 %v388, %v390
    %v392 = vrot.slane %v385, %v391
    %v393 = vcombine.low %v284, %v300
    %v395 = vunpack.c.l.s4 1983009808
    %v396 = vunpack.c.0.s8 %v395
    %v397 = vlaneseq
    %v398 = vshrl.u32 %v397, 7
    %v399 = vsub.s32 %v396, %v398
    %v400 = vrot.slane %v393, %v399
    %v401 = vcombine.low %v292, %v308
    %v403 = vunpack.c.l.s4 1983009808
    %v404 = vunpack.c.0.s8 %v403
    %v405 = vlaneseq
    %v406 = vshrl.u32 %v405, 7
    %v407 = vsub.s32 %v404, %v406
    %v408 = vrot.slane %v401, %v407
    %v409 = vcombine.low %v384, %v392
    %v410 = vcombine.high %v384, %v392
    %v412 = vunpack.c.l.s4 1934713408
    %v413 = vunpack.c.0.s8 %v412
    %v414 = vlaneseq
    %v415 = vshrl.u32 %v414, 7
    %v416 = vsub.s32 %v413, %v415
    %v417 = vrot.slane %v409, %v416
    %v419 = vunpack.c.l.s4 1934713408
    %v420 = vunpack.c.0.s8 %v419
    %v421 = vlaneseq
    %v422 = vshrl.u32 %v421, 7
    %v423 = vsub.s32 %v420, %v422
    %v424 = vrot.slane %v410, %v423
    %v425 = vcombine.low %v400, %v408
    %v426 = vcombine.high %v400, %v408
    %v428 = vunpack.c.l.s4 1934713408
    %v429 = vunpack.c.0.s8 %v428
    %v430 = vlaneseq
    %v431 = vshrl.u32 %v430, 7
    %v432 = vsub.s32 %v429, %v431
    %v433 = vrot.slane %v425, %v432
    %v435 = vunpack.c.l.s4 1934713408
    %v436 = vunpack.c.0.s8 %v435
    %v437 = vlaneseq
    %v438 = vshrl.u32 %v437, 7
    %v439 = vsub.s32 %v436, %v438
    %v440 = vrot.slane %v426, %v439
    %v441 = vcombine.low %v417, %v433
    %v442 = vcombine.high %v417, %v433
    %v443 = vcombine.low %v424, %v440
    %v444 = vcombine.high %v424, %v440
    %447 = vrot.lane.b32.xlu0 %v374, 8
    %v448 = vpop.permute.xlu0 %447
    %449 = vrot.lane.b32.xlu0 %v442, 8
    %v450 = vpop.permute.xlu0 %449
    %455 = vrot.lane.b32.xlu0 %v375, 16
    %v456 = vpop.permute.xlu0 %455
    %457 = vrot.lane.b32.xlu0 %v443, 16
    %v458 = vpop.permute.xlu0 %457
    %463 = vrot.lane.b32.xlu0 %v376, 24
    %v464 = vpop.permute.xlu0 %463
    %465 = vrot.lane.b32.xlu0 %v444, 24
    %v466 = vpop.permute.xlu0 %465
    %vm469 = vcmask 64512
    %v470 = vsel %vm469, %v373, %v448
    %v471 = vsel %vm469, %v441, %v450
    %vm472 = vcmask 130048
    %v473 = vsel %vm472, %v470, %v456
    %v474 = vsel %vm472, %v471, %v458
    %vm475 = vcmask 195584
    %v476 = vsel %vm475, %v473, %v464
    %v477 = vsel %vm475, %v474, %v466
    %v478 = vmul.f32 %v134, %v476
    %v479 = vmul.f32 %v139, %v477
    %v480 = vsel %vm60, %v478, 0.0
    %v481 = vrot.slane %v480, 4
    %v482 = vadd.f32 %v480, %v481
    %v483 = vrot.slane %v482, 2
    %v484 = vadd.f32 %v482, %v483
    %v485 = vrot.slane %v484, 1
    %v486 = vadd.f32 %v484, %v485
    %v487 = vsel %vm60, %v479, 0.0
    %v488 = vrot.slane %v487, 4
    %v489 = vadd.f32 %v487, %v488
    %v490 = vrot.slane %v489, 2
    %v491 = vadd.f32 %v489, %v490
    %v492 = vrot.slane %v491, 1
    %v493 = vadd.f32 %v491, %v492
    %v494 = vld [vmem:[#allocation7] sm:$0x1]
    %v496 = vlaneseq
    %v497 = vshrl.u32 %v496, 7
    %v498 = vsub.s32 0, %v497
    %v499 = vrot.slane %v494, %v498
    %v501 = vadd.f32 %v486, %v499
    %v502 = vadd.f32 %v493, %v499
    %v505 = vrot.slane %v502, 7
    %vm506 = vcmask 1041409
    %v507 = vsel %vm506, %v505, %v501
    %vm509 = vcmask 254976
    %510 = vst.msk [vmem:[#allocation8] sm:$0x3] %vm509, %v507
    // Predicated region
    $region26: #{tpu_custom_call.1} parent=1 // pred_check
      _
    $region27: #{tpu_custom_call.1} parent=1 // pred_check_branch
      %512 = sbr.rel (0) target = $region29
    $region28: #{tpu_custom_call.1} parent=1 // pred_region
      %s514 = ssub.s32 32, 32
      %515 = vsyncadd [#allocation4], %s514
      %s517 = sshll.u32 [#allocation8], 4
      %s518 = int_to_ptr.vmem [resolvable:$true] %s517
      %520 = dma.vmem_to_hbm [thread:$0]  %s518, 32, %s3, [#allocation4]
    $region29: #{tpu_custom_call.1} parent=1 // pred_fallthru
      _
    // Predicated region
    $region30: #{tpu_custom_call.1} parent=1 // pred_check
      _
    $region31: #{tpu_custom_call.1} parent=1 // pred_check_branch
      %522 = sbr.rel (0) target = $region33
    $region32: #{tpu_custom_call.1} parent=1 // pred_region
      %523 = dma.done [#allocation4], 32
    $region33: #{tpu_custom_call.1} parent=1 // pred_fallthru
      _
    %524 = vsyncpa [#allocation3], 1
    %525 = vsyncpa [#allocation6], 1
    %526 = vsyncpa [#allocation4], 1

// kernel: tpu_custom_call.1
$region0: #{tpu_custom_call.1}
  #allocation0 [shape = 'u32[]', space=smem, size = 0x4, offset = 0x4, fixed_abs, tag = 'smem constant byte address 0x4 - core index']
  #allocation1 [shape = 'u32[144,128]{1,0:T(1,128)}', space=vmem, size = 0x12000, scoped, tag = 'internal scratch']
  %s0 = inlined_call_operand.hbm [shape: f32[2,8,32], index: 0, kind: input, shape index: {}]
  %s1 = inlined_call_operand.hbm [shape: f32[32,36], index: 1, kind: input, shape index: {}]
  %s2 = inlined_call_operand.hbm [shape: f32[1,32], index: 2, kind: input, shape index: {}]
  %s3 = inlined_call_operand.hbm [shape: f32[2,32], index: 3, kind: output, shape index: {}]
  %s4 = sld [smem:[#allocation0]]
  $region34: #{tpu_custom_call.1} parent=0
    _
  %s6 = ssub.s32 1, %s4
  %s7 = scalar_select 0, %s6, %s4
  $region1: #{tpu_custom_call.1} parent=0
    #allocation2 [shape = 'u8[8192]{0}', space=vmem, size = 0x2000, scoped, tag = 'input window, operand 0, single buffered']
    #allocation3 [shape = 's32[1]{0}', space=sflag, size = 0x4, scoped, tag = 'scoped memory for tpu_custom_call.1']
    #allocation4 [shape = 's32[1]{0}', space=sflag, size = 0x4, scoped, tag = 'scoped memory for tpu_custom_call.1']
    #allocation5 [shape = 'u8[16384]{0}', space=vmem, size = 0x4000, scoped, tag = 'input window, operand 1, single buffered']
    #allocation6 [shape = 's32[1]{0}', space=sflag, size = 0x4, scoped, tag = 'scoped memory for tpu_custom_call.1']
    #allocation7 [shape = 'u8[512]{0}', space=vmem, size = 0x400, scoped, tag = 'input window, operand 2, single buffered']
    #allocation8 [shape = 'u8[1024]{0}', space=vmem, size = 0x400, scoped, tag = 'output window, operand 0, single buffered']
    %8 = vsyncpa [#allocation3], 0
    %9 = vsyncpa [#allocation6], 0
    %10 = vsyncpa [#allocation4], 0
    // Predicated region
    $region2: #{tpu_custom_call.1} parent=1 // pred_check
      _
    $region3: #{tpu_custom_call.1} parent=1 // pred_check_branch
      %12 = sbr.rel (0) target = $region5
    $region4: #{tpu_custom_call.1} parent=1 // pred_region
      %s14 = ssub.s32 256, 256
      %15 = vsyncadd [#allocation3], %s14
      %s16 = sshll.u32 [#allocation2], 4
      %s17 = int_to_ptr.vmem [resolvable:$true] %s16
      %22 = dma.hbm_to_vmem [thread:$0]  %s0, 256, %s17, [#allocation3], 128, 128, 8
    $region5: #{tpu_custom_call.1} parent=1 // pred_fallthru
      _
    // Predicated region
    $region6: #{tpu_custom_call.1} parent=1 // pred_check
      _
    $region7: #{tpu_custom_call.1} parent=1 // pred_check_branch
      %24 = sbr.rel (0) target = $region9
    $region8: #{tpu_custom_call.1} parent=1 // pred_region
      %s26 = ssub.s32 512, 512
      %27 = vsyncadd [#allocation6], %s26
      %s28 = sshll.u32 [#allocation5], 4
      %s29 = int_to_ptr.vmem [resolvable:$true] %s28
      %34 = dma.hbm_to_vmem [thread:$0]  %s1, 512, %s29, [#allocation6], 128, 128, 8
    $region9: #{tpu_custom_call.1} parent=1 // pred_fallthru
      _
    // Predicated region
    $region10: #{tpu_custom_call.1} parent=1 // pred_check
      _
    $region11: #{tpu_custom_call.1} parent=1 // pred_check_branch
      %36 = sbr.rel (0) target = $region13
    $region12: #{tpu_custom_call.1} parent=1 // pred_region
      %s38 = ssub.s32 16, 16
      %39 = vsyncadd [#allocation6], %s38
      %s41 = sshll.u32 [#allocation7], 4
      %s42 = int_to_ptr.vmem [resolvable:$true] %s41
      %44 = dma.hbm_to_vmem [thread:$0]  %s2, 16, %s42, [#allocation6]
    $region13: #{tpu_custom_call.1} parent=1 // pred_fallthru
      _
    // Predicated region
    $region14: #{tpu_custom_call.1} parent=1 // pred_check
      _
    $region15: #{tpu_custom_call.1} parent=1 // pred_check_branch
      %46 = sbr.rel (0) target = $region17
    $region16: #{tpu_custom_call.1} parent=1 // pred_region
      %47 = dma.done [#allocation3], 256
    $region17: #{tpu_custom_call.1} parent=1 // pred_fallthru
      _
    // Predicated region
    $region18: #{tpu_custom_call.1} parent=1 // pred_check
      _
    $region19: #{tpu_custom_call.1} parent=1 // pred_check_branch
      %49 = sbr.rel (0) target = $region21
    $region20: #{tpu_custom_call.1} parent=1 // pred_region
      %50 = dma.done [#allocation6], 512
    $region21: #{tpu_custom_call.1} parent=1 // pred_fallthru
      _
    // Predicated region
    $region22: #{tpu_custom_call.1} parent=1 // pred_check
      _
    $region23: #{tpu_custom_call.1} parent=1 // pred_check_branch
      %52 = sbr.rel (0) target = $region25
    $region24: #{tpu_custom_call.1} parent=1 // pred_region
      %53 = dma.done [#allocation6], 16
    $region25: #{tpu_custom_call.1} parent=1 // pred_fallthru
      _
    %v54 = vld [vmem:[#allocation2] sm:$0xff]
    %v55 = vld [vmem:[#allocation2 + $0x8] sm:$0xff]
    %v56 = vld [vmem:[#allocation5] sm:$0xff]
    %v57 = vld [vmem:[#allocation5 + $0x8] sm:$0xff]
    %v58 = vld [vmem:[#allocation5 + $0x10] sm:$0xff]
    %v59 = vld [vmem:[#allocation5 + $0x18] sm:$0xff]
    %vm60 = vcmask 261120
    %v62 = vsel %vm60, %v54, 0
    %v65 = vsel %vm60, %v55, 0
    %67 = vmatprep.subr.mxu0 0.0
    %68 = vmatpush1.msra.mxu0 %v56
    %69 = vmatprep.subr.mxu0 0.0
    %70 = vmatpush1.msra.mxu0 %v57
    %71 = vmatprep.subr.mxu0 0.0
    %72 = vmatpush1.msra.mxu0 %v58
    %73 = vmatprep.subr.mxu0 0.0
    %74 = vmatpush1.msra.mxu0 %v59
    %75 = vmatprep.subr.mxu0 0.0
    %76 = vmatpush1.msra.mxu0 0.0
    %77 = vmatprep.subr.mxu0 0.0
    %78 = vmatpush1.msra.mxu0 0.0
    %79 = vmatprep.subr.mxu0 0.0
    %80 = vmatpush1.msra.mxu0 0.0
    %81 = vmatprep.subr.mxu0 0.0
    %82 = vmatpush1.msra.mxu0 0.0
    %83 = vmatprep.subr.mxu0 0.0
    %84 = vmatpush1.msra.mxu0 0.0
    %85 = vmatprep.subr.mxu0 0.0
    %86 = vmatpush1.msra.mxu0 0.0
    %87 = vmatprep.subr.mxu0 0.0
    %88 = vmatpush1.msra.mxu0 0.0
    %89 = vmatprep.subr.mxu0 0.0
    %90 = vmatpush1.msra.mxu0 0.0
    %91 = vmatprep.subr.mxu0 0.0
    %92 = vmatpush1.msra.mxu0 0.0
    %93 = vmatprep.subr.mxu0 0.0
    %94 = vmatpush1.msra.mxu0 0.0
    %95 = vmatprep.subr.mxu0 0.0
    %96 = vmatpush1.msra.mxu0 0.0
    %97 = vmatprep.subr.mxu0 0.0
    %98 = vmatpush1.msra.mxu0 0.0
    %99 = vmatprep.subr.mxu0 0.0
    %100 = vmatpush1.msra.mxu0 0.0
    %101 = vmatprep.subr.mxu0 0.0
    %102 = vmatpush1.msra.mxu0 0.0
    %103 = vmatprep.subr.mxu0 0.0
    %104 = vmatpush1.msra.mxu0 0.0
    %105 = vmatprep.subr.mxu0 0.0
    %106 = vmatpush1.msra.mxu0 0.0
    %107 = vmatprep.subr.mxu0 0.0
    %108 = vmatpush1.msra.mxu0 0.0
    %109 = vmatprep.subr.mxu0 0.0
    %110 = vmatpush1.msra.mxu0 0.0
    %111 = vmatprep.subr.mxu0 0.0
    %112 = vmatpush1.msra.mxu0 0.0
    %113 = vmatprep.subr.mxu0 0.0
    %114 = vmatpush1.msra.mxu0 0.0
    %115 = vmatprep.subr.mxu0 0.0
    %116 = vmatpush1.msra.mxu0 0.0
    %117 = vmatprep.subr.mxu0 0.0
    %118 = vmatpush1.msra.mxu0 0.0
    %119 = vmatprep.subr.mxu0 0.0
    %120 = vmatpush1.msra.mxu0 0.0
    %121 = vmatprep.subr.mxu0 0.0
    %122 = vmatpush1.msra.mxu0 0.0
    %123 = vmatprep.subr.mxu0 0.0
    %124 = vmatpush1.msra.mxu0 0.0
    %125 = vmatprep.subr.mxu0 0.0
    %126 = vmatpush1.msra.mxu0 0.0
    %127 = vmatprep.subr.mxu0 0.0
    %128 = vmatpush1.msra.mxu0 0.0
    %129 = vmatprep.subr.mxu0 0.0
    %130 = vmatpush1.msra.mxu0 0.0
    %131 = vmatprep.mubr.f32.mxu0 0.0
    %132 = vmatmul.mubr.f32.gmra.mrb[0].mxu0 %v62
    %v133 = vpop.f32.mrb[0].mxu0
    %v134 = vadd.f32 0.0, %v133
    %v135 = vpop.f32.mrb[0].mxu0
    %136 = vmatprep.mubr.f32.mxu0 0.0
    %137 = vmatmul.mubr.f32.gmra.mrb[0].mxu0 %v65
    %v138 = vpop.f32.mrb[0].mxu0
    %v139 = vadd.f32 0.0, %v138
    %v140 = vpop.f32.mrb[0].mxu0
    %141 = vdwg.mxu0
    %vm142 = vcmask 294144
    %v143 = vsel %vm142, %v134, -inf
    %v144 = vrot.slane %v143, 4
    %v145 = vmax.f32 %v143, %v144
    %v146 = vrot.slane %v145, 2
    %v147 = vmax.f32 %v145, %v146
    %v148 = vrot.slane %v147, 1
    %v149 = vmax.f32 %v147, %v148
    %v150 = vsel %vm142, %v139, -inf
    %v151 = vrot.slane %v150, 4
    %v152 = vmax.f32 %v150, %v151
    %v153 = vrot.slane %v152, 2
    %v154 = vmax.f32 %v152, %v153
    %v155 = vrot.slane %v154, 1
    %v156 = vmax.f32 %v154, %v155
    %v157 = vsub.f32 %v134, %v149
    %v158 = vsub.f32 %v139, %v156
    %v159 = vmul.f32 %v157, 1.442695
    %v160 = vpow.pop %v159
    %v161 = vmul.f32 %v158, 1.442695
    %v162 = vpow.pop %v161
    %v163 = vsel %vm142, %v160, 0.0
    %v164 = vrot.slane %v163, 4
    %v165 = vadd.f32 %v163, %v164
    %v166 = vrot.slane %v165, 2
    %v167 = vadd.f32 %v165, %v166
    %v168 = vrot.slane %v167, 1
    %v169 = vadd.f32 %v167, %v168
    %v170 = vsel %vm142, %v162, 0.0
    %v171 = vrot.slane %v170, 4
    %v172 = vadd.f32 %v170, %v171
    %v173 = vrot.slane %v172, 2
    %v174 = vadd.f32 %v172, %v173
    %v175 = vrot.slane %v174, 1
    %v176 = vadd.f32 %v174, %v175
    %v177 = vrcp.pop %v169
    %v178 = vmul.f32 %v160, %v177
    %v179 = vrcp.pop %v176
    %v180 = vmul.f32 %v162, %v179
    %v181 = vlaneseq
    %v182 = vshrl.u32 %v181, 7
    %v183 = vsub.s32 0, %v182
    %v184 = vrot.slane %v178, %v183
    %s186 = sor.u32 256, 32
    %187 = vbcast.lane.b32.xlu0 %v184, %s186
    %v188 = vpop.permute.xlu0 %187
    %v189 = vlaneseq
    %v190 = vshrl.u32 %v189, 7
    %v191 = vsub.s32 1, %v190
    %v192 = vrot.slane %v178, %v191
    %s194 = sor.u32 256, 32
    %195 = vbcast.lane.b32.xlu0 %v192, %s194
    %v196 = vpop.permute.xlu0 %195
    %v197 = vlaneseq
    %v198 = vshrl.u32 %v197, 7
    %v199 = vsub.s32 2, %v198
    %v200 = vrot.slane %v178, %v199
    %s202 = sor.u32 256, 32
    %203 = vbcast.lane.b32.xlu0 %v200, %s202
    %v204 = vpop.permute.xlu0 %203
    %v205 = vlaneseq
    %v206 = vshrl.u32 %v205, 7
    %v207 = vsub.s32 3, %v206
    %v208 = vrot.slane %v178, %v207
    %s210 = sor.u32 256, 32
    %211 = vbcast.lane.b32.xlu0 %v208, %s210
    %v212 = vpop.permute.xlu0 %211
    %v213 = vlaneseq
    %v214 = vshrl.u32 %v213, 7
    %v215 = vsub.s32 4, %v214
    %v216 = vrot.slane %v178, %v215
    %s218 = sor.u32 256, 32
    %219 = vbcast.lane.b32.xlu0 %v216, %s218
    %v220 = vpop.permute.xlu0 %219
    %v221 = vlaneseq
    %v222 = vshrl.u32 %v221, 7
    %v223 = vsub.s32 5, %v222
    %v224 = vrot.slane %v178, %v223
    %s226 = sor.u32 256, 32
    %227 = vbcast.lane.b32.xlu0 %v224, %s226
    %v228 = vpop.permute.xlu0 %227
    %v229 = vlaneseq
    %v230 = vshrl.u32 %v229, 7
    %v231 = vsub.s32 6, %v230
    %v232 = vrot.slane %v178, %v231
    %s234 = sor.u32 256, 32
    %235 = vbcast.lane.b32.xlu0 %v232, %s234
    %v236 = vpop.permute.xlu0 %235
    %v237 = vlaneseq
    %v238 = vshrl.u32 %v237, 7
    %v239 = vsub.s32 7, %v238
    %v240 = vrot.slane %v178, %v239
    %s242 = sor.u32 256, 32
    %243 = vbcast.lane.b32.xlu0 %v240, %s242
    %v244 = vpop.permute.xlu0 %243
    %v245 = vlaneseq
    %v246 = vshrl.u32 %v245, 7
    %v247 = vsub.s32 0, %v246
    %v248 = vrot.slane %v180, %v247
    %s250 = sor.u32 256, 32
    %251 = vbcast.lane.b32.xlu0 %v248, %s250
    %v252 = vpop.permute.xlu0 %251
    %v253 = vlaneseq
    %v254 = vshrl.u32 %v253, 7
    %v255 = vsub.s32 1, %v254
    %v256 = vrot.slane %v180, %v255
    %s258 = sor.u32 256, 32
    %259 = vbcast.lane.b32.xlu0 %v256, %s258
    %v260 = vpop.permute.xlu0 %259
    %v261 = vlaneseq
    %v262 = vshrl.u32 %v261, 7
    %v263 = vsub.s32 2, %v262
    %v264 = vrot.slane %v180, %v263
    %s266 = sor.u32 256, 32
    %267 = vbcast.lane.b32.xlu0 %v264, %s266
    %v268 = vpop.permute.xlu0 %267
    %v269 = vlaneseq
    %v270 = vshrl.u32 %v269, 7
    %v271 = vsub.s32 3, %v270
    %v272 = vrot.slane %v180, %v271
    %s274 = sor.u32 256, 32
    %275 = vbcast.lane.b32.xlu0 %v272, %s274
    %v276 = vpop.permute.xlu0 %275
    %v277 = vlaneseq
    %v278 = vshrl.u32 %v277, 7
    %v279 = vsub.s32 4, %v278
    %v280 = vrot.slane %v180, %v279
    %s282 = sor.u32 256, 32
    %283 = vbcast.lane.b32.xlu0 %v280, %s282
    %v284 = vpop.permute.xlu0 %283
    %v285 = vlaneseq
    %v286 = vshrl.u32 %v285, 7
    %v287 = vsub.s32 5, %v286
    %v288 = vrot.slane %v180, %v287
    %s290 = sor.u32 256, 32
    %291 = vbcast.lane.b32.xlu0 %v288, %s290
    %v292 = vpop.permute.xlu0 %291
    %v293 = vlaneseq
    %v294 = vshrl.u32 %v293, 7
    %v295 = vsub.s32 6, %v294
    %v296 = vrot.slane %v180, %v295
    %s298 = sor.u32 256, 32
    %299 = vbcast.lane.b32.xlu0 %v296, %s298
    %v300 = vpop.permute.xlu0 %299
    %v301 = vlaneseq
    %v302 = vshrl.u32 %v301, 7
    %v303 = vsub.s32 7, %v302
    %v304 = vrot.slane %v180, %v303
    %s306 = sor.u32 256, 32
    %307 = vbcast.lane.b32.xlu0 %v304, %s306
    %v308 = vpop.permute.xlu0 %307
    %v309 = vcombine.low %v188, %v204
    %v311 = vunpack.c.l.s4 1983009808
    %v312 = vunpack.c.0.s8 %v311
    %v313 = vlaneseq
    %v314 = vshrl.u32 %v313, 7
    %v315 = vsub.s32 %v312, %v314
    %v316 = vrot.slane %v309, %v315
    %v317 = vcombine.low %v196, %v212
    %v319 = vunpack.c.l.s4 1983009808
    %v320 = vunpack.c.0.s8 %v319
    %v321 = vlaneseq
    %v322 = vshrl.u32 %v321, 7
    %v323 = vsub.s32 %v320, %v322
    %v324 = vrot.slane %v317, %v323
    %v325 = vcombine.low %v220, %v236
    %v327 = vunpack.c.l.s4 1983009808
    %v328 = vunpack.c.0.s8 %v327
    %v329 = vlaneseq
    %v330 = vshrl.u32 %v329, 7
    %v331 = vsub.s32 %v328, %v330
    %v332 = vrot.slane %v325, %v331
    %v333 = vcombine.low %v228, %v244
    %v335 = vunpack.c.l.s4 1983009808
    %v336 = vunpack.c.0.s8 %v335
    %v337 = vlaneseq
    %v338 = vshrl.u32 %v337, 7
    %v339 = vsub.s32 %v336, %v338
    %v340 = vrot.slane %v333, %v339
    %v341 = vcombine.low %v316, %v324
    %v342 = vcombine.high %v316, %v324
    %v344 = vunpack.c.l.s4 1934713408
    %v345 = vunpack.c.0.s8 %v344
    %v346 = vlaneseq
    %v347 = vshrl.u32 %v346, 7
    %v348 = vsub.s32 %v345, %v347
    %v349 = vrot.slane %v341, %v348
    %v351 = vunpack.c.l.s4 1934713408
    %v352 = vunpack.c.0.s8 %v351
    %v353 = vlaneseq
    %v354 = vshrl.u32 %v353, 7
    %v355 = vsub.s32 %v352, %v354
    %v356 = vrot.slane %v342, %v355
    %v357 = vcombine.low %v332, %v340
    %v358 = vcombine.high %v332, %v340
    %v360 = vunpack.c.l.s4 1934713408
    %v361 = vunpack.c.0.s8 %v360
    %v362 = vlaneseq
    %v363 = vshrl.u32 %v362, 7
    %v364 = vsub.s32 %v361, %v363
    %v365 = vrot.slane %v357, %v364
    %v367 = vunpack.c.l.s4 1934713408
    %v368 = vunpack.c.0.s8 %v367
    %v369 = vlaneseq
    %v370 = vshrl.u32 %v369, 7
    %v371 = vsub.s32 %v368, %v370
    %v372 = vrot.slane %v358, %v371
    %v373 = vcombine.low %v349, %v365
    %v374 = vcombine.high %v349, %v365
    %v375 = vcombine.low %v356, %v372
    %v376 = vcombine.high %v356, %v372
    %v377 = vcombine.low %v252, %v268
    %v379 = vunpack.c.l.s4 1983009808
    %v380 = vunpack.c.0.s8 %v379
    %v381 = vlaneseq
    %v382 = vshrl.u32 %v381, 7
    %v383 = vsub.s32 %v380, %v382
    %v384 = vrot.slane %v377, %v383
    %v385 = vcombine.low %v260, %v276
    %v387 = vunpack.c.l.s4 1983009808
    %v388 = vunpack.c.0.s8 %v387
    %v389 = vlaneseq
    %v390 = vshrl.u32 %v389, 7
    %v391 = vsub.s32 %v388, %v390
    %v392 = vrot.slane %v385, %v391
    %v393 = vcombine.low %v284, %v300
    %v395 = vunpack.c.l.s4 1983009808
    %v396 = vunpack.c.0.s8 %v395
    %v397 = vlaneseq
    %v398 = vshrl.u32 %v397, 7
    %v399 = vsub.s32 %v396, %v398
    %v400 = vrot.slane %v393, %v399
    %v401 = vcombine.low %v292, %v308
    %v403 = vunpack.c.l.s4 1983009808
    %v404 = vunpack.c.0.s8 %v403
    %v405 = vlaneseq
    %v406 = vshrl.u32 %v405, 7
    %v407 = vsub.s32 %v404, %v406
    %v408 = vrot.slane %v401, %v407
    %v409 = vcombine.low %v384, %v392
    %v410 = vcombine.high %v384, %v392
    %v412 = vunpack.c.l.s4 1934713408
    %v413 = vunpack.c.0.s8 %v412
    %v414 = vlaneseq
    %v415 = vshrl.u32 %v414, 7
    %v416 = vsub.s32 %v413, %v415
    %v417 = vrot.slane %v409, %v416
    %v419 = vunpack.c.l.s4 1934713408
    %v420 = vunpack.c.0.s8 %v419
    %v421 = vlaneseq
    %v422 = vshrl.u32 %v421, 7
    %v423 = vsub.s32 %v420, %v422
    %v424 = vrot.slane %v410, %v423
    %v425 = vcombine.low %v400, %v408
    %v426 = vcombine.high %v400, %v408
    %v428 = vunpack.c.l.s4 1934713408
    %v429 = vunpack.c.0.s8 %v428
    %v430 = vlaneseq
    %v431 = vshrl.u32 %v430, 7
    %v432 = vsub.s32 %v429, %v431
    %v433 = vrot.slane %v425, %v432
    %v435 = vunpack.c.l.s4 1934713408
    %v436 = vunpack.c.0.s8 %v435
    %v437 = vlaneseq
    %v438 = vshrl.u32 %v437, 7
    %v439 = vsub.s32 %v436, %v438
    %v440 = vrot.slane %v426, %v439
    %v441 = vcombine.low %v417, %v433
    %v442 = vcombine.high %v417, %v433
    %v443 = vcombine.low %v424, %v440
    %v444 = vcombine.high %v424, %v440
    %447 = vrot.lane.b32.xlu0 %v374, 8
    %v448 = vpop.permute.xlu0 %447
    %449 = vrot.lane.b32.xlu0 %v442, 8
    %v450 = vpop.permute.xlu0 %449
    %455 = vrot.lane.b32.xlu0 %v375, 16
    %v456 = vpop.permute.xlu0 %455
    %457 = vrot.lane.b32.xlu0 %v443, 16
    %v458 = vpop.permute.xlu0 %457
    %463 = vrot.lane.b32.xlu0 %v376, 24
    %v464 = vpop.permute.xlu0 %463
    %465 = vrot.lane.b32.xlu0 %v444, 24
    %v466 = vpop.permute.xlu0 %465
    %vm469 = vcmask 64512
    %v470 = vsel %vm469, %v373, %v448
    %v471 = vsel %vm469, %v441, %v450
    %vm472 = vcmask 130048
    %v473 = vsel %vm472, %v470, %v456
    %v474 = vsel %vm472, %v471, %v458
    %vm475 = vcmask 195584
    %v476 = vsel %vm475, %v473, %v464
    %v477 = vsel %vm475, %v474, %v466
    %v478 = vmul.f32 %v134, %v476
    %v479 = vmul.f32 %v139, %v477
    %v480 = vsel %vm60, %v478, 0.0
    %v481 = vrot.slane %v480, 4
    %v482 = vadd.f32 %v480, %v481
    %v483 = vrot.slane %v482, 2
    %v484 = vadd.f32 %v482, %v483
    %v485 = vrot.slane %v484, 1
    %v486 = vadd.f32 %v484, %v485
    %v487 = vsel %vm60, %v479, 0.0
    %v488 = vrot.slane %v487, 4
    %v489 = vadd.f32 %v487, %v488
    %v490 = vrot.slane %v489, 2
    %v491 = vadd.f32 %v489, %v490
    %v492 = vrot.slane %v491, 1
    %v493 = vadd.f32 %v491, %v492
    %v494 = vld [vmem:[#allocation7] sm:$0x1]
    %v496 = vlaneseq
    %v497 = vshrl.u32 %v496, 7
    %v498 = vsub.s32 0, %v497
    %v499 = vrot.slane %v494, %v498
    %v501 = vadd.f32 %v486, %v499
    %v502 = vadd.f32 %v493, %v499
    %v505 = vrot.slane %v502, 7
    %vm506 = vcmask 1041409
    %v507 = vsel %vm506, %v505, %v501
    %vm509 = vcmask 254976
    %510 = vst.msk [vmem:[#allocation8] sm:$0x3] %vm509, %v507
    // Predicated region
    $region26: #{tpu_custom_call.1} parent=1 // pred_check
      _
    $region27: #{tpu_custom_call.1} parent=1 // pred_check_branch
      %512 = sbr.rel (0) target = $region29
    $region28: #{tpu_custom_call.1} parent=1 // pred_region
      %s514 = ssub.s32 32, 32
      %515 = vsyncadd [#allocation4], %s514
      %s517 = sshll.u32 [#allocation8], 4
      %s518 = int_to_ptr.vmem [resolvable:$true] %s517
      %520 = dma.vmem_to_hbm [thread:$0]  %s518, 32, %s3, [#allocation4]
    $region29: #{tpu_custom_call.1} parent=1 // pred_fallthru
      _
    // Predicated region
    $region30: #{tpu_custom_call.1} parent=1 // pred_check
      _
    $region31: #{tpu_custom_call.1} parent=1 // pred_check_branch
      %522 = sbr.rel (0) target = $region33
    $region32: #{tpu_custom_call.1} parent=1 // pred_region
      %523 = dma.done [#allocation4], 32
    $region33: #{tpu_custom_call.1} parent=1 // pred_fallthru
      _
    %524 = vsyncpa [#allocation3], 1
    %525 = vsyncpa [#allocation6], 1
    %526 = vsyncpa [#allocation4], 1

</llo_original>
